<compile_context>
chip_gen: v5e
topology: v5e:2x2
jax: 0.10.0
libtpu: 0.0.40
codegen_flags: <defaults>
</compile_context>

<pallas_src>
import math
import numpy as np
import jax
import jax.numpy as jnp
from jax.experimental import pallas as pl
from jax.experimental.pallas import tpu as pltpu


_VMEM_LIMIT = 64 * 1024 * 1024


def _round_up(v, m):
    return (v + m - 1) // m * m


# ---------------------------------------------------------------------------
# Kernel 1: fused 3x3 conv (stride 1, pad 1) + folded inference BN + ReLU.
# The padded image is row-flattened (glue); inside the kernel the 9 taps are
# concatenated on the lane axis -> a single (Rw, 9*Cin) x (9*Cin, Co) matmul.
# ---------------------------------------------------------------------------
def _make_conv3x3_bn_relu_kernel(H, Wp):
    Rw = H * Wp

    def kernel(x_ref, w_ref, sc_ref, b_ref, out_ref):
        x = x_ref[0]                                   # (Rin, Cin) bf16, row-flattened padded img
        # im2col on the lane axis: 9 shifted slabs -> (Rw, 9*Cin)
        slabs = [x[dh * Wp + dw: dh * Wp + dw + Rw, :]
                 for dh in range(3) for dw in range(3)]
        xcat = jnp.concatenate(slabs, axis=-1)
        # single MXU matmul, f32 accumulation
        acc = jnp.dot(xcat, w_ref[...], preferred_element_type=jnp.float32)
        y = acc * sc_ref[...] + b_ref[...]             # folded BN (inference) + conv bias, f32 VPU
        out_ref[0] = jnp.maximum(y, 0.0).astype(out_ref.dtype)   # ReLU, store bf16

    return kernel


def conv3x3_bn_relu(x, params):
    """x: (N, H, W, Cin) NHWC (any float dtype).  params = (w9, scale, bias).  -> (N, H, W, Co) bf16."""
    w9, scale, bias = params                           # w9: (9*Cin, Co) bf16 (tap-major)
    N, H, W, Cin = x.shape
    Co = w9.shape[-1]
    Wp = _round_up(W + 2, 8)                           # sublane-align dh*Wp slab offsets
    Rin = (H + 3) * Wp                                 # +1 top pad row, +2 bottom pad rows (guard)
    Rw = H * Wp

    # glue: cast to bf16 + zero pad (left/top = 1, right/bottom widened for alignment + guard),
    # then free row-flatten.
    xp = jnp.pad(x.astype(jnp.bfloat16),
                 ((0, 0), (1, 2), (1, Wp - W - 1), (0, 0)))        # (N, H+3, Wp, Cin)
    xf = xp.reshape(N, Rin, Cin)

    out_flat = pl.pallas_call(
        _make_conv3x3_bn_relu_kernel(H, Wp),
        out_shape=jax.ShapeDtypeStruct((N, Rw, Co), jnp.bfloat16),
        grid=(N,),
        in_specs=[
            pl.BlockSpec((1, Rin, Cin), lambda n: (n, 0, 0)),
            pl.BlockSpec((9 * Cin, Co), lambda n: (0, 0)),
            pl.BlockSpec((1, Co), lambda n: (0, 0)),
            pl.BlockSpec((1, Co), lambda n: (0, 0)),
        ],
        out_specs=pl.BlockSpec((1, Rw, Co), lambda n: (n, 0, 0)),
        compiler_params=pltpu.CompilerParams(
            dimension_semantics=("parallel",),
            vmem_limit_bytes=_VMEM_LIMIT),
    )(xf, w9, scale, bias)
    # glue: drop the junk wrap/alignment columns, restore spatial shape
    return out_flat.reshape(N, H, Wp, Co)[:, :, :W, :]


# ---------------------------------------------------------------------------
# Kernel 2: bilinear 2x upsample (== ConvTranspose2d(C,C,4,stride=2,pad=1,
# groups=C) with fill_up_weights) fused with the skip add of node(up + skip).
# Output is written in (N, H, 2, W, 2*C) phase layout so the interleave to
# (N, 2H, 2W, C) is a free contiguous reshape (no HBM transpose).
# ---------------------------------------------------------------------------
def _bilinear_kernel_1d(f):
    """Reproduces fill_up_weights' separable 1-D kernel for kernel_size = 2*f."""
    k = 2 * f
    fc = math.ceil(k / 2)
    c = (2 * fc - 1 - fc % 2) / (2.0 * fc)
    return [1.0 - abs(i / fc - c) for i in range(k)]


def _make_upsample2x_add_kernel(H, W, C):
    k = _bilinear_kernel_1d(2)                         # [0.25, 0.75, 0.75, 0.25]
    # out[2m + a] = sum_{(d, coef) in taps[a]} coef * x[m + d]   (zero outside image)
    taps = {0: ((-1, k[3]), (0, k[1])), 1: ((0, k[2]), (1, k[0]))}

    def kernel(p_ref, skip_ref, out_ref):
        x = p_ref[0].astype(jnp.float32)               # (H+2, W+2, C) padded proj output
        sk = skip_ref[0]                               # (H, 2, W, 2*C) skip, phase layout (bf16)
        for a in (0, 1):
            cols = []
            for b in (0, 1):
                acc = None
                for dh, ch in taps[a]:
                    for dw, cw in taps[b]:
                        t = (ch * cw) * x[1 + dh:1 + dh + H, 1 + dw:1 + dw + W, :]
                        acc = t if acc is None else acc + t
                cols.append(acc)
            u = jnp.concatenate(cols, axis=-1)         # (H, W, 2*C): both b-phases on the lanes
            u = u + sk[:, a, :, :].astype(jnp.float32)  # fused skip add (f32 VPU)
            out_ref[0, :, a, :, :] = u.astype(out_ref.dtype)

    return kernel


def upsample2x_add(p, skip):
    """Returns bilinear-2x-upsample(p) + skip, shape (N, 2H, 2W, C), bf16."""
    N, H, W, C = p.shape
    assert skip.shape == (N, 2 * H, 2 * W, C), (skip.shape, p.shape)
    p_pad = jnp.pad(p.astype(jnp.bfloat16), ((0, 0), (1, 1), (1, 1), (0, 0)))
    # free reshape into phase layout (no transpose / no extra HBM pass)
    skip_r = skip.astype(jnp.bfloat16).reshape(N, H, 2, W, 2 * C)

    out = pl.pallas_call(
        _make_upsample2x_add_kernel(H, W, C),
        out_shape=jax.ShapeDtypeStruct((N, H, 2, W, 2 * C), jnp.bfloat16),
        grid=(N,),
        in_specs=[
            pl.BlockSpec((1, H + 2, W + 2, C), lambda n: (n, 0, 0, 0)),
            pl.BlockSpec((1, H, 2, W, 2 * C), lambda n: (n, 0, 0, 0, 0)),
        ],
        out_specs=pl.BlockSpec((1, H, 2, W, 2 * C), lambda n: (n, 0, 0, 0, 0)),
        compiler_params=pltpu.CompilerParams(
            dimension_semantics=("parallel",),
            vmem_limit_bytes=_VMEM_LIMIT),
    )(p_pad, skip_r)
    # glue: free interleaving reshape -> (N, 2H, 2W, C)
    return out.reshape(N, 2 * H, 2 * W, C)


# ---------------------------------------------------------------------------
# Parameters (deterministic, in-script) and module structure
# ---------------------------------------------------------------------------
def _init_deform_conv(key, cin, cout):
    # TODO(synk): DCNv2's deformable offset/mask branch (incl. the sigmoid(0)=0.5 modulation at
    # its standard zero-init) has no clean Pallas equivalent; implemented as a plain 3x3 conv.
    kw, kb = jax.random.split(key)
    w = jax.random.normal(kw, (3, 3, cin, cout), jnp.float32) / math.sqrt(9.0 * cin)
    conv_b = 0.01 * jax.random.normal(kb, (cout,), jnp.float32)
    # BatchNorm2d(cout) folded in inference mode with its default deterministic statistics
    # (gamma=1, beta=0, running_mean=0, running_var=1, eps=1e-5).
    gamma = jnp.ones((cout,), jnp.float32)
    beta = jnp.zeros((cout,), jnp.float32)
    mean = jnp.zeros((cout,), jnp.float32)
    var = jnp.ones((cout,), jnp.float32)
    scale = gamma / jnp.sqrt(var + 1e-5)
    bias = beta - mean * scale + scale * conv_b        # conv bias folded into BN bias
    # Weights pre-reshaped to (9*Cin, Co) in tap-major order to match the in-kernel lane concat.
    w9 = w.reshape(9 * cin, cout).astype(jnp.bfloat16)
    return (w9, scale.reshape(1, cout), bias.reshape(1, cout))


class IDAUp:
    def __init__(self, key, o, channels, up_f):
        self.proj, self.node = {}, {}
        for i in range(1, len(channels)):
            key, k1, k2 = jax.random.split(key, 3)
            self.proj[i] = _init_deform_conv(k1, channels[i], o)
            self.node[i] = _init_deform_conv(k2, o, o)
            assert int(up_f[i]) == 2, "DLAUp only ever constructs 2x upsampling stages"

    def __call__(self, layers, startp, endp):
        for i in range(startp + 1, endp):
            idx = i - startp
            p = conv3x3_bn_relu(layers[i], self.proj[idx])      # proj_i
            s = upsample2x_add(p, layers[i - 1])                # up_i(p) + skip   (fused kernel)
            layers[i] = conv3x3_bn_relu(s, self.node[idx])      # node_i


class DLAUp:
    def __init__(self, key, start_p, channels, scales, in_channels=None):
        self.start_p = start_p
        if in_channels is None:
            in_channels = list(channels)
        channels = list(channels)
        in_channels = list(in_channels)
        scales = np.array(scales, dtype=int)
        self.idas = []
        for i in range(len(channels) - 1):
            j = -i - 2
            key, sub = jax.random.split(key)
            self.idas.append(IDAUp(sub, channels[j], in_channels[j:],
                                   scales[j:] // scales[j]))
            scales[j + 1:] = scales[j]
            in_channels[j + 1:] = [channels[j] for _ in channels[j + 1:]]

    def __call__(self, layers_nchw):
        # layout: accept NCHW (PyTorch), run kernels in NHWC/bf16, return NCHW f32 outputs.
        layers = [jnp.transpose(x, (0, 2, 3, 1)) for x in layers_nchw]
        out = [layers[-1]]
        for i in range(len(layers) - self.start_p - 1):
            self.idas[i](layers, len(layers) - i - 2, len(layers))
            out.insert(0, layers[-1])
        return [jnp.transpose(o, (0, 3, 1, 2)).astype(jnp.float32) for o in out]


if __name__ == "__main__":
    key = jax.random.PRNGKey(0)
    k_in, k_param = jax.random.split(key)

    channels = [8, 16, 32, 64]
    scales = [1, 2, 4, 8]
    N, S = 2, 32  # base spatial 32 -> pyramid spatials 32, 16, 8, 4

    layer_keys = jax.random.split(k_in, len(channels))
    layers = [
        jax.random.normal(layer_keys[l],
                          (N, channels[l], S // (2 ** l), S // (2 ** l)), jnp.float32)
        for l in range(len(channels))
    ]

    model = DLAUp(k_param, start_p=0, channels=channels, scales=scales)
    outs = model(layers)
    for o in outs:
        jax.block_until_ready(o)

    # sanity: expected output pyramid shapes (NCHW) and finiteness
    expected = [(N, 8, 32, 32), (N, 16, 16, 16), (N, 32, 8, 8), (N, 64, 4, 4)]
    assert [tuple(o.shape) for o in outs] == expected, [tuple(o.shape) for o in outs]
    assert all(bool(jnp.isfinite(o).all()) for o in outs)
    print("KERNEL_OK")
</pallas_src>

<mosaic_0001>
module attributes {stable_mosaic.version = 11 : i64} {
  func.func @kernel(%arg0: i32, %arg1: memref<1x56x64xbf16, #tpu.memory_space<vmem>>, %arg2: memref<576x32xbf16, #tpu.memory_space<vmem>>, %arg3: memref<1x32xf32, #tpu.memory_space<vmem>>, %arg4: memref<1x32xf32, #tpu.memory_space<vmem>>, %arg5: memref<1x32x32xbf16, #tpu.memory_space<vmem>>) attributes {dimension_semantics = [#tpu.dimension_semantics<parallel>], iteration_bounds = array<i64: 2>, scalar_prefetch = 0 : i64, scratch_operands = 0 : i64, tpu.core_type = #tpu.core_type<tc>, window_params = [{transform_indices = @transform_0, window_bounds = array<i64: 1, 56, 64>}, {pipeline_mode = #tpu.pipeline_mode<synchronous>, transform_indices = @transform_1, window_bounds = array<i64: 576, 32>}, {pipeline_mode = #tpu.pipeline_mode<synchronous>, transform_indices = @transform_2, window_bounds = array<i64: 1, 32>}, {pipeline_mode = #tpu.pipeline_mode<synchronous>, transform_indices = @transform_3, window_bounds = array<i64: 1, 32>}, {transform_indices = @transform_4, window_bounds = array<i64: 1, 32, 32>}]} {
    %c0 = arith.constant 0 : index
    %c0_0 = arith.constant 0 : index
    %c0_1 = arith.constant 0 : index
    %0 = vector.load %arg1[%c0, %c0_0, %c0_1] : memref<1x56x64xbf16, #tpu.memory_space<vmem>>, vector<1x56x64xbf16>
    %1 = vector.shape_cast %0 : vector<1x56x64xbf16> to vector<56x64xbf16>
    %2 = vector.extract_strided_slice %1 {offsets = [0, 0], sizes = [32, 64], strides = [1, 1]} : vector<56x64xbf16> to vector<32x64xbf16>
    %3 = vector.extract_strided_slice %1 {offsets = [1, 0], sizes = [32, 64], strides = [1, 1]} : vector<56x64xbf16> to vector<32x64xbf16>
    %4 = vector.extract_strided_slice %1 {offsets = [2, 0], sizes = [32, 64], strides = [1, 1]} : vector<56x64xbf16> to vector<32x64xbf16>
    %5 = vector.extract_strided_slice %1 {offsets = [8, 0], sizes = [32, 64], strides = [1, 1]} : vector<56x64xbf16> to vector<32x64xbf16>
    %6 = vector.extract_strided_slice %1 {offsets = [9, 0], sizes = [32, 64], strides = [1, 1]} : vector<56x64xbf16> to vector<32x64xbf16>
    %7 = vector.extract_strided_slice %1 {offsets = [10, 0], sizes = [32, 64], strides = [1, 1]} : vector<56x64xbf16> to vector<32x64xbf16>
    %8 = vector.extract_strided_slice %1 {offsets = [16, 0], sizes = [32, 64], strides = [1, 1]} : vector<56x64xbf16> to vector<32x64xbf16>
    %9 = vector.extract_strided_slice %1 {offsets = [17, 0], sizes = [32, 64], strides = [1, 1]} : vector<56x64xbf16> to vector<32x64xbf16>
    %10 = vector.extract_strided_slice %1 {offsets = [18, 0], sizes = [32, 64], strides = [1, 1]} : vector<56x64xbf16> to vector<32x64xbf16>
    %11 = tpu.concatenate %2, %3, %4, %5, %6, %7, %8, %9, %10 in 1 : vector<32x64xbf16>, vector<32x64xbf16>, vector<32x64xbf16>, vector<32x64xbf16>, vector<32x64xbf16>, vector<32x64xbf16>, vector<32x64xbf16>, vector<32x64xbf16>, vector<32x64xbf16> -> vector<32x576xbf16>
    %c0_2 = arith.constant 0 : index
    %c0_3 = arith.constant 0 : index
    %12 = vector.load %arg2[%c0_2, %c0_3] : memref<576x32xbf16, #tpu.memory_space<vmem>>, vector<576x32xbf16>
    %cst = arith.constant dense<0.000000e+00> : vector<32x32xf32>
    %13 = tpu.matmul %11, %12, %cst {dimension_numbers = #tpu.dot_dimension_numbers<[1], [0], [0], [1], [0, 0, 1, 1], [], []>} : vector<32x576xbf16>, vector<576x32xbf16>, vector<32x32xf32> -> vector<32x32xf32>
    %c0_4 = arith.constant 0 : index
    %c0_5 = arith.constant 0 : index
    %14 = vector.load %arg3[%c0_4, %c0_5] : memref<1x32xf32, #tpu.memory_space<vmem>>, vector<1x32xf32>
    %15 = vector.broadcast %14 : vector<1x32xf32> to vector<32x32xf32>
    %16 = arith.mulf %13, %15 : vector<32x32xf32>
    %c0_6 = arith.constant 0 : index
    %c0_7 = arith.constant 0 : index
    %17 = vector.load %arg4[%c0_6, %c0_7] : memref<1x32xf32, #tpu.memory_space<vmem>>, vector<1x32xf32>
    %18 = vector.broadcast %17 : vector<1x32xf32> to vector<32x32xf32>
    %19 = arith.addf %16, %18 : vector<32x32xf32>
    %cst_8 = arith.constant 0.000000e+00 : f32
    %20 = vector.broadcast %cst_8 : f32 to vector<32x32xf32>
    %21 = arith.maximumf %19, %20 : vector<32x32xf32>
    %22 = arith.truncf %21 : vector<32x32xf32> to vector<32x32xbf16>
    %c0_9 = arith.constant 0 : index
    %c0_10 = arith.constant 0 : index
    %c0_11 = arith.constant 0 : index
    %23 = vector.load %arg5[%c0_9, %c0_10, %c0_11] : memref<1x32x32xbf16, #tpu.memory_space<vmem>>, vector<1x32x32xbf16>
    %24 = vector.shape_cast %23 : vector<1x32x32xbf16> to vector<32x32xbf16>
    %25 = vector.shape_cast %22 : vector<32x32xbf16> to vector<1x32x32xbf16>
    tpu.vector_store %arg5[%c0_9, %c0_10, %c0_11], %25 {strides = array<i32>} : memref<1x32x32xbf16, #tpu.memory_space<vmem>>, vector<1x32x32xbf16>,
    return
  }
  func.func @transform_0(%arg0: i32) -> (i32, i32, i32) {
    %c0_i32 = arith.constant 0 : i32
    %c0_i32_0 = arith.constant 0 : i32
    %c0_i32_1 = arith.constant 0 : i32
    return %arg0, %c0_i32, %c0_i32_0 : i32, i32, i32
  }
  func.func @transform_1(%arg0: i32) -> (i32, i32) {
    %c0_i32 = arith.constant 0 : i32
    %c0_i32_0 = arith.constant 0 : i32
    %c0_i32_1 = arith.constant 0 : i32
    return %c0_i32, %c0_i32_0 : i32, i32
  }
  func.func @transform_2(%arg0: i32) -> (i32, i32) {
    %c0_i32 = arith.constant 0 : i32
    %c0_i32_0 = arith.constant 0 : i32
    %c0_i32_1 = arith.constant 0 : i32
    return %c0_i32, %c0_i32_0 : i32, i32
  }
  func.func @transform_3(%arg0: i32) -> (i32, i32) {
    %c0_i32 = arith.constant 0 : i32
    %c0_i32_0 = arith.constant 0 : i32
    %c0_i32_1 = arith.constant 0 : i32
    return %c0_i32, %c0_i32_0 : i32, i32
  }
  func.func @transform_4(%arg0: i32) -> (i32, i32, i32) {
    %c0_i32 = arith.constant 0 : i32
    %c0_i32_0 = arith.constant 0 : i32
    %c0_i32_1 = arith.constant 0 : i32
    return %arg0, %c0_i32, %c0_i32_0 : i32, i32, i32
  }
}

</mosaic_0001>

<llo_original>
// kernel: tpu_custom_call.1
$region0: #{tpu_custom_call.1}
  #allocation0 [shape = 'u32[]', space=smem, size = 0x4, offset = 0x4, fixed_abs, tag = 'smem constant byte address 0x4 - core index']
  #allocation1 [shape = 'u32[72,128]{1,0:T(1,128)}', space=vmem, size = 0x9000, scoped, tag = 'internal scratch']
  %s0 = inlined_call_operand.vmem [shape: bf16[2,56,64], index: 0, kind: input, shape index: {}]
  %s1 = inlined_call_operand.vmem [shape: bf16[576,32], index: 1, kind: input, shape index: {}]
  %s2 = inlined_call_operand.vmem [shape: f32[1,32], index: 2, kind: input, shape index: {}]
  %s3 = inlined_call_operand.vmem [shape: f32[1,32], index: 3, kind: input, shape index: {}]
  %s4 = inlined_call_operand.hbm [shape: bf16[2,32,32], index: 4, kind: output, shape index: {}]
  %s5 = sld [smem:[#allocation0]]
  $region49: #{tpu_custom_call.1} parent=0
    _
  %s7 = ssub.s32 1, %s5
  %s8 = scalar_select 0, %s7, %s5
  $region1: #{tpu_custom_call.1} parent=0
    #allocation2 [shape = 'u8[16384]{0}', space=vmem, size = 0x4000, scoped, tag = 'output window, operand 0']
    #allocation3 [shape = 's32[2]{0}', space=sflag, size = 0x8, scoped, tag = 'scoped memory for tpu_custom_call.1']
    %9 = vsyncpa [#allocation3], 0
    %s10 = scalar_lea.sflag [#allocation3], 1
    %11 = vsyncpa %s10, 0
    loop: start=0, step=1, limit=4
    $region2: #{tpu_custom_call.1} parent=1 // loop_pre_header
      _
    $region3: #{tpu_custom_call.1} parent=1 // loop_header
      %s13 = sphi 0, %s17
      %p14 = scmp.ge.s32.totalorder %s13, 4
      %s23 = sphi 0, %s25
      %s26 = sphi 0, %s23
      %s27 = sphi 0, %s26
      %s43 = sphi 0, %s27
      %s47 = sphi 0, %s47
      %s49 = sphi 0, %s47
      %s50 = sphi 0, %s49
      %s64 = sphi 0, %s50
      %s68 = sphi 0, %s68
      %s70 = sphi 0, %s68
      %s71 = sphi 0, %s70
      %s85 = sphi 0, %s71
      %s89 = sphi 0, %s89
      %s91 = sphi 0, %s89
      %s92 = sphi 0, %s91
      %s106 = sphi 0, %s92
      %s112 = sphi 0, %s114
      %s115 = sphi 0, %s112
      %s116 = sphi 0, %s115
      %s132 = sphi 0, %s116
    $region4: #{tpu_custom_call.1} parent=1 // loop_header_branch
      %16 = sbr.rel (%p14) target = $region8
    $region5: #{tpu_custom_call.1} parent=1 // loop_body
      %s18 = ssub.s32 %s13, 1
      %s19 = ssub.s32 %s13, 2
      %s20 = sadd.s32 %s13, 1
      %s21 = ssub.s32 %s13, %s20
      %p22 = scmp.eq.s32.totalorder %s21, 0
      %s24 = sadd.s32 %s23, 1
      %s25 = scalar_select %p22, %s23, %s24
      %p28 = pneg %p22
      %p29 = scmp.eq.s32.totalorder %s13, 1
      %p30 = por %p28, %p29
      %p31 = scmp.ne.s32.totalorder %s23, %s26
      %p32 = scmp.eq.s32.totalorder %s13, 0
      %p33 = por %p31, %p32
      %p34 = scmp.ne.s32.totalorder %s23, %s26
      %p35 = scmp.eq.s32.totalorder %s18, 1
      %p36 = por %p34, %p35
      %p37 = scmp.ne.s32.totalorder %s26, %s27
      %p38 = scmp.eq.s32.totalorder %s18, 0
      %p39 = por %p37, %p38
      %p40 = scmp.ne.s32.totalorder %s26, %s27
      %p41 = scmp.eq.s32.totalorder %s19, 1
      %p42 = por %p40, %p41
      %p44 = scmp.ne.s32.totalorder %s27, %s43
      %p45 = scmp.eq.s32.totalorder %s19, 0
      %p46 = por %p44, %p45
      %s48 = sadd.s32 %s47, 1
      %p51 = scmp.eq.s32.totalorder %s13, 1
      %p52 = scmp.ne.s32.totalorder %s47, %s49
      %p53 = scmp.eq.s32.totalorder %s13, 0
      %p54 = por %p52, %p53
      %p55 = scmp.ne.s32.totalorder %s47, %s49
      %p56 = scmp.eq.s32.totalorder %s18, 1
      %p57 = por %p55, %p56
      %p58 = scmp.ne.s32.totalorder %s49, %s50
      %p59 = scmp.eq.s32.totalorder %s18, 0
      %p60 = por %p58, %p59
      %p61 = scmp.ne.s32.totalorder %s49, %s50
      %p62 = scmp.eq.s32.totalorder %s19, 1
      %p63 = por %p61, %p62
      %p65 = scmp.ne.s32.totalorder %s50, %s64
      %p66 = scmp.eq.s32.totalorder %s19, 0
      %p67 = por %p65, %p66
      %s69 = sadd.s32 %s68, 1
      %p72 = scmp.eq.s32.totalorder %s13, 1
      %p73 = scmp.ne.s32.totalorder %s68, %s70
      %p74 = scmp.eq.s32.totalorder %s13, 0
      %p75 = por %p73, %p74
      %p76 = scmp.ne.s32.totalorder %s68, %s70
      %p77 = scmp.eq.s32.totalorder %s18, 1
      %p78 = por %p76, %p77
      %p79 = scmp.ne.s32.totalorder %s70, %s71
      %p80 = scmp.eq.s32.totalorder %s18, 0
      %p81 = por %p79, %p80
      %p82 = scmp.ne.s32.totalorder %s70, %s71
      %p83 = scmp.eq.s32.totalorder %s19, 1
      %p84 = por %p82, %p83
      %p86 = scmp.ne.s32.totalorder %s71, %s85
      %p87 = scmp.eq.s32.totalorder %s19, 0
      %p88 = por %p86, %p87
      %s90 = sadd.s32 %s89, 1
      %p93 = scmp.eq.s32.totalorder %s13, 1
      %p94 = scmp.ne.s32.totalorder %s89, %s91
      %p95 = scmp.eq.s32.totalorder %s13, 0
      %p96 = por %p94, %p95
      %p97 = scmp.ne.s32.totalorder %s89, %s91
      %p98 = scmp.eq.s32.totalorder %s18, 1
      %p99 = por %p97, %p98
      %p100 = scmp.ne.s32.totalorder %s91, %s92
      %p101 = scmp.eq.s32.totalorder %s18, 0
      %p102 = por %p100, %p101
      %p103 = scmp.ne.s32.totalorder %s91, %s92
      %p104 = scmp.eq.s32.totalorder %s19, 1
      %p105 = por %p103, %p104
      %p107 = scmp.ne.s32.totalorder %s92, %s106
      %p108 = scmp.eq.s32.totalorder %s19, 0
      %p109 = por %p107, %p108
      %s110 = ssub.s32 %s13, %s20
      %p111 = scmp.eq.s32.totalorder %s110, 0
      %s113 = sadd.s32 %s112, 1
      %s114 = scalar_select %p111, %s112, %s113
      %p117 = pneg %p111
      %p118 = scmp.eq.s32.totalorder %s13, 1
      %p119 = por %p117, %p118
      %p120 = scmp.ne.s32.totalorder %s112, %s115
      %p121 = scmp.eq.s32.totalorder %s13, 0
      %p122 = por %p120, %p121
      %p123 = scmp.ne.s32.totalorder %s112, %s115
      %p124 = scmp.eq.s32.totalorder %s18, 1
      %p125 = por %p123, %p124
      %p126 = scmp.ne.s32.totalorder %s115, %s116
      %p127 = scmp.eq.s32.totalorder %s18, 0
      %p128 = por %p126, %p127
      %p129 = scmp.ne.s32.totalorder %s115, %s116
      %p130 = scmp.eq.s32.totalorder %s19, 1
      %p131 = por %p129, %p130
      %p133 = scmp.ne.s32.totalorder %s116, %s132
      %p134 = scmp.eq.s32.totalorder %s19, 0
      %p135 = por %p133, %p134
      %p136 = scmp.le.s32.totalorder 1, %s13
      %p137 = scmp.lt.s32.totalorder %s13, 3
      %p138 = pnand %p136, %p137
      %p139 = pneg %p138
      // Predicated region
      $region9: #{tpu_custom_call.1} parent=5 // pred_check
        _
      $region10: #{tpu_custom_call.1} parent=5 // pred_check_branch
        %141 = sbr.rel (%p138) target = $region12
      $region11: #{tpu_custom_call.1} parent=5 // pred_region
        %s142 = ssub.s32 %s13, 1
        // Predicated region
        $region13: #{tpu_custom_call.1} parent=11 // pred_check
          %p143 = pneg %p60
        $region14: #{tpu_custom_call.1} parent=11 // pred_check_branch
          %145 = sbr.rel (%p143) target = $region16
        $region15: #{tpu_custom_call.1} parent=11 // pred_region
          _
        $region16: #{tpu_custom_call.1} parent=11 // pred_fallthru
          _
        // Predicated region
        $region17: #{tpu_custom_call.1} parent=11 // pred_check
          %p146 = pneg %p81
        $region18: #{tpu_custom_call.1} parent=11 // pred_check_branch
          %148 = sbr.rel (%p146) target = $region20
        $region19: #{tpu_custom_call.1} parent=11 // pred_region
          _
        $region20: #{tpu_custom_call.1} parent=11 // pred_fallthru
          _
        // Predicated region
        $region21: #{tpu_custom_call.1} parent=11 // pred_check
          %p149 = pneg %p102
        $region22: #{tpu_custom_call.1} parent=11 // pred_check_branch
          %151 = sbr.rel (%p149) target = $region24
        $region23: #{tpu_custom_call.1} parent=11 // pred_region
          _
        $region24: #{tpu_custom_call.1} parent=11 // pred_fallthru
          _
      $region12: #{tpu_custom_call.1} parent=5 // pred_fallthru
        _
      %p152 = scmp.lt.s32.totalorder %s13, 2
      // Predicated region
      $region25: #{tpu_custom_call.1} parent=5 // pred_check
        %p153 = pneg %p152
      $region26: #{tpu_custom_call.1} parent=5 // pred_check_branch
        %155 = sbr.rel (%p153) target = $region28
      $region27: #{tpu_custom_call.1} parent=5 // pred_region
        // Predicated region
        $region29: #{tpu_custom_call.1} parent=27 // pred_check
          %p156 = pneg %p33
        $region30: #{tpu_custom_call.1} parent=27 // pred_check_branch
          %158 = sbr.rel (%p156) target = $region32
        $region31: #{tpu_custom_call.1} parent=27 // pred_region
          %p159 = scmp.lt.s32.totalorder %s13, 1
          %s160 = scalar_select %p159, %s13, 1
          %s161 = smul.addr %s160, 7
          %s162 = smul.addr %s161, 4
          %s163 = scalar_lea.vmem %s0, %s162
        $region32: #{tpu_custom_call.1} parent=27 // pred_fallthru
          _
      $region28: #{tpu_custom_call.1} parent=5 // pred_fallthru
        _
      %p164 = scmp.le.s32.totalorder 1, %s13
      %p165 = scmp.lt.s32.totalorder %s13, 3
      %p166 = pnand %p164, %p165
      %p167 = pneg %p166
      // Predicated region
      $region33: #{tpu_custom_call.1} parent=5 // pred_check
        _
      $region34: #{tpu_custom_call.1} parent=5 // pred_check_branch
        %169 = sbr.rel (%p166) target = $region36
      $region35: #{tpu_custom_call.1} parent=5 // pred_region
        %s170 = ssub.s32 %s13, 1
        %p171 = scmp.lt.s32.totalorder %s18, 1
        %s172 = scalar_select %p171, %s18, 1
        %s173 = smul.addr %s172, 7
        %s174 = smul.addr %s173, 4
        %s175 = scalar_lea.vmem %s0, %s174
        %p176 = pneg %p39
        %p177 = pneg %p36
        %p178 = pneg %p60
        %p179 = pneg %p57
        %p180 = pneg %p81
        %p181 = pneg %p78
        %p182 = pneg %p102
        %p183 = pneg %p99
        %p184 = pneg %p128
        %p185 = pneg %p125
        %s186 = sand.u32 %s115, 1
        %s187 = scalar_lea.sflag [#allocation3], %s186
        %s188 = sand.u32 %s115, 1
        %s189 = smul.addr %s188, 16
        %s190 = scalar_lea.vmem [#allocation2], %s189
        %p191 = scmp.lt.s32.totalorder %s18, 1
        %s192 = scalar_select %p191, %s18, 1
        %s193 = smul.addr %s192, 7
        %s194 = smul.addr %s193, 4
        %s195 = scalar_lea.vmem %s0, %s194
        %v197 = vld [vmem:[%s195] sm:$0xf]
        %v198 = vld [vmem:[%s195 + $0x4] sm:$0xf]
        %v199 = vld [vmem:[%s195 + $0x8] sm:$0xf]
        %v200 = vld [vmem:[%s195 + $0xc] sm:$0xf]
        %v201 = vld [vmem:[%s195 + $0x10] sm:$0xf]
        %v202 = vld [vmem:[%s195 + $0x14] sm:$0xf]
        %v203 = vld [vmem:[%s195 + $0x18] sm:$0xf]
        %v208 = vunpack.c.l.b16 %v197
        %v209 = vunpack.c.l.b16 %v198
        %v210 = vunpack.c.l.b16 %v199
        %v211 = vunpack.c.l.b16 %v200
        %v212 = vpack.c.b16 %v209, %v208
        %v213 = vpack.c.b16 %v211, %v210
        %v215 = vunpack.c.l.b16 %v201
        %v216 = vpack.c.b16 %v215, %v215
        %vm217 = vsmask.f32 7424
        %v219 = vshrl.u32 %v212, 16
        %v221 = vshll.u32 %v212, 16
        %v223 = vrot.slane %v221, 1
        %v224 = vor.u32 %v219, %v223
        %v226 = vshll.u32 %v213, 16
        %v228 = vrot.slane %v226, 1
        %v229 = vsel %vm217, %v224, %v228
        %v230 = vshrl.u32 %v213, 16
        %v232 = vor.u32 %v230, %v228
        %v234 = vshll.u32 %v216, 16
        %v236 = vrot.slane %v234, 1
        %v237 = vsel %vm217, %v232, %v236
        %238 = vrot.lane.b32.xlu0 %v229, 64
        %v239 = vpop.permute.xlu0 %238
        %240 = vrot.lane.b32.xlu0 %v237, 64
        %v241 = vpop.permute.xlu0 %240
        %vm242 = vcmask 1046528
        %v243 = vrot.slane %v212, 1
        %v244 = vrot.slane %v213, 1
        %v245 = vsel %vm242, %v243, %v244
        %v246 = vrot.slane %v216, 1
        %v247 = vsel %vm242, %v244, %v246
        %v248 = vpack.c.b16 %v210, %v209
        %v249 = vpack.c.b16 %v215, %v211
        %250 = vrot.lane.b32.xlu0 %v248, 64
        %v251 = vpop.permute.xlu0 %250
        %252 = vrot.lane.b32.xlu0 %v249, 64
        %v253 = vpop.permute.xlu0 %252
        %v255 = vunpack.c.l.b16 %v202
        %v256 = vpack.c.b16 %v255, %v255
        %v258 = vshrl.u32 %v248, 16
        %v260 = vshll.u32 %v248, 16
        %v262 = vrot.slane %v260, 1
        %v263 = vor.u32 %v258, %v262
        %v265 = vshll.u32 %v249, 16
        %v267 = vrot.slane %v265, 1
        %v268 = vsel %vm217, %v263, %v267
        %v269 = vshrl.u32 %v249, 16
        %v271 = vor.u32 %v269, %v267
        %v273 = vshll.u32 %v256, 16
        %v275 = vrot.slane %v273, 1
        %v276 = vsel %vm217, %v271, %v275
        %v277 = vrot.slane %v248, 1
        %v278 = vrot.slane %v249, 1
        %v279 = vsel %vm242, %v277, %v278
        %v280 = vrot.slane %v256, 1
        %v281 = vsel %vm242, %v278, %v280
        %282 = vrot.lane.b32.xlu0 %v279, 64
        %v283 = vpop.permute.xlu0 %282
        %284 = vrot.lane.b32.xlu0 %v281, 64
        %v285 = vpop.permute.xlu0 %284
        %v286 = vpack.c.b16 %v255, %v215
        %v288 = vunpack.c.l.b16 %v203
        %v289 = vpack.c.b16 %v288, %v288
        %v291 = vshll.u32 %v286, 16
        %v293 = vrot.slane %v291, 1
        %v294 = vsel %vm217, %v232, %v293
        %v295 = vshrl.u32 %v286, 16
        %v297 = vor.u32 %v295, %v293
        %v299 = vshll.u32 %v289, 16
        %v301 = vrot.slane %v299, 1
        %v302 = vsel %vm217, %v297, %v301
        %303 = vrot.lane.b32.xlu0 %v294, 64
        %v304 = vpop.permute.xlu0 %303
        %305 = vrot.lane.b32.xlu0 %v302, 64
        %v306 = vpop.permute.xlu0 %305
        %v307 = vrot.slane %v286, 1
        %v308 = vsel %vm242, %v244, %v307
        %v309 = vrot.slane %v289, 1
        %v310 = vsel %vm242, %v307, %v309
        %vm311 = vcmask 523264
        %v313 = vsel %vm311, %v212, %v239
        %v316 = vsel %vm311, %v213, %v241
        %v320 = vsel %vm311, %v245, %v251
        %v324 = vsel %vm311, %v247, %v253
        %v328 = vsel %vm311, %v268, %v283
        %v332 = vsel %vm311, %v276, %v285
        %v335 = vsel %vm311, %v213, %v304
        %v338 = vsel %vm311, %v286, %v306
        %v340 = vld [vmem:[%s1] sm:$0xf]
        %v341 = vld [vmem:[%s1 + $0x4] sm:$0xf]
        %v342 = vld [vmem:[%s1 + $0x8] sm:$0xf]
        %v343 = vld [vmem:[%s1 + $0xc] sm:$0xf]
        %v344 = vld [vmem:[%s1 + $0x10] sm:$0xf]
        %v345 = vld [vmem:[%s1 + $0x14] sm:$0xf]
        %v346 = vld [vmem:[%s1 + $0x18] sm:$0xf]
        %v347 = vld [vmem:[%s1 + $0x1c] sm:$0xf]
        %v348 = vld [vmem:[%s1 + $0x20] sm:$0xf]
        %v349 = vld [vmem:[%s1 + $0x24] sm:$0xf]
        %v350 = vld [vmem:[%s1 + $0x28] sm:$0xf]
        %v351 = vld [vmem:[%s1 + $0x2c] sm:$0xf]
        %v352 = vld [vmem:[%s1 + $0x30] sm:$0xf]
        %v353 = vld [vmem:[%s1 + $0x34] sm:$0xf]
        %v354 = vld [vmem:[%s1 + $0x38] sm:$0xf]
        %v355 = vld [vmem:[%s1 + $0x3c] sm:$0xf]
        %v356 = vld [vmem:[%s1 + $0x40] sm:$0xf]
        %v357 = vld [vmem:[%s1 + $0x44] sm:$0xf]
        %v358 = vld [vmem:[%s1 + $0x48] sm:$0xf]
        %v359 = vld [vmem:[%s1 + $0x4c] sm:$0xf]
        %v360 = vld [vmem:[%s1 + $0x50] sm:$0xf]
        %v361 = vld [vmem:[%s1 + $0x54] sm:$0xf]
        %v362 = vld [vmem:[%s1 + $0x58] sm:$0xf]
        %v363 = vld [vmem:[%s1 + $0x5c] sm:$0xf]
        %v364 = vld [vmem:[%s1 + $0x60] sm:$0xf]
        %v365 = vld [vmem:[%s1 + $0x64] sm:$0xf]
        %v366 = vld [vmem:[%s1 + $0x68] sm:$0xf]
        %v367 = vld [vmem:[%s1 + $0x6c] sm:$0xf]
        %v368 = vld [vmem:[%s1 + $0x70] sm:$0xf]
        %v369 = vld [vmem:[%s1 + $0x74] sm:$0xf]
        %v370 = vld [vmem:[%s1 + $0x78] sm:$0xf]
        %v371 = vld [vmem:[%s1 + $0x7c] sm:$0xf]
        %v372 = vld [vmem:[%s1 + $0x80] sm:$0xf]
        %v373 = vld [vmem:[%s1 + $0x84] sm:$0xf]
        %v374 = vld [vmem:[%s1 + $0x88] sm:$0xf]
        %v375 = vld [vmem:[%s1 + $0x8c] sm:$0xf]
        %v376 = vld [vmem:[%s1 + $0x90] sm:$0xf]
        %v377 = vld [vmem:[%s1 + $0x94] sm:$0xf]
        %v378 = vld [vmem:[%s1 + $0x98] sm:$0xf]
        %v379 = vld [vmem:[%s1 + $0x9c] sm:$0xf]
        %v380 = vld [vmem:[%s1 + $0xa0] sm:$0xf]
        %v381 = vld [vmem:[%s1 + $0xa4] sm:$0xf]
        %v382 = vld [vmem:[%s1 + $0xa8] sm:$0xf]
        %v383 = vld [vmem:[%s1 + $0xac] sm:$0xf]
        %v384 = vld [vmem:[%s1 + $0xb0] sm:$0xf]
        %v385 = vld [vmem:[%s1 + $0xb4] sm:$0xf]
        %v386 = vld [vmem:[%s1 + $0xb8] sm:$0xf]
        %v387 = vld [vmem:[%s1 + $0xbc] sm:$0xf]
        %v388 = vld [vmem:[%s1 + $0xc0] sm:$0xf]
        %v389 = vld [vmem:[%s1 + $0xc4] sm:$0xf]
        %v390 = vld [vmem:[%s1 + $0xc8] sm:$0xf]
        %v391 = vld [vmem:[%s1 + $0xcc] sm:$0xf]
        %v392 = vld [vmem:[%s1 + $0xd0] sm:$0xf]
        %v393 = vld [vmem:[%s1 + $0xd4] sm:$0xf]
        %v394 = vld [vmem:[%s1 + $0xd8] sm:$0xf]
        %v395 = vld [vmem:[%s1 + $0xdc] sm:$0xf]
        %v396 = vld [vmem:[%s1 + $0xe0] sm:$0xf]
        %v397 = vld [vmem:[%s1 + $0xe4] sm:$0xf]
        %v398 = vld [vmem:[%s1 + $0xe8] sm:$0xf]
        %v399 = vld [vmem:[%s1 + $0xec] sm:$0xf]
        %v400 = vld [vmem:[%s1 + $0xf0] sm:$0xf]
        %v401 = vld [vmem:[%s1 + $0xf4] sm:$0xf]
        %v402 = vld [vmem:[%s1 + $0xf8] sm:$0xf]
        %v403 = vld [vmem:[%s1 + $0xfc] sm:$0xf]
        %v404 = vld [vmem:[%s1 + $0x100] sm:$0xf]
        %v405 = vld [vmem:[%s1 + $0x104] sm:$0xf]
        %v406 = vld [vmem:[%s1 + $0x108] sm:$0xf]
        %v407 = vld [vmem:[%s1 + $0x10c] sm:$0xf]
        %v408 = vld [vmem:[%s1 + $0x110] sm:$0xf]
        %v409 = vld [vmem:[%s1 + $0x114] sm:$0xf]
        %v410 = vld [vmem:[%s1 + $0x118] sm:$0xf]
        %v411 = vld [vmem:[%s1 + $0x11c] sm:$0xf]
        %v484 = vunpack.c.l.b16 %v340
        %v485 = vunpack.c.l.b16 %v341
        %v486 = vunpack.c.l.b16 %v342
        %v487 = vunpack.c.l.b16 %v343
        %v488 = vunpack.c.l.b16 %v344
        %v489 = vunpack.c.l.b16 %v345
        %v490 = vunpack.c.l.b16 %v346
        %v491 = vunpack.c.l.b16 %v347
        %v492 = vunpack.c.l.b16 %v348
        %v493 = vunpack.c.l.b16 %v349
        %v494 = vunpack.c.l.b16 %v350
        %v495 = vunpack.c.l.b16 %v351
        %v496 = vunpack.c.l.b16 %v352
        %v497 = vunpack.c.l.b16 %v353
        %v498 = vunpack.c.l.b16 %v354
        %v499 = vunpack.c.l.b16 %v355
        %v500 = vunpack.c.l.b16 %v356
        %v501 = vunpack.c.l.b16 %v357
        %v502 = vunpack.c.l.b16 %v358
        %v503 = vunpack.c.l.b16 %v359
        %v504 = vunpack.c.l.b16 %v360
        %v505 = vunpack.c.l.b16 %v361
        %v506 = vunpack.c.l.b16 %v362
        %v507 = vunpack.c.l.b16 %v363
        %v508 = vunpack.c.l.b16 %v364
        %v509 = vunpack.c.l.b16 %v365
        %v510 = vunpack.c.l.b16 %v366
        %v511 = vunpack.c.l.b16 %v367
        %v512 = vunpack.c.l.b16 %v368
        %v513 = vunpack.c.l.b16 %v369
        %v514 = vunpack.c.l.b16 %v370
        %v515 = vunpack.c.l.b16 %v371
        %v516 = vunpack.c.l.b16 %v372
        %v517 = vunpack.c.l.b16 %v373
        %v518 = vunpack.c.l.b16 %v374
        %v519 = vunpack.c.l.b16 %v375
        %v520 = vunpack.c.l.b16 %v376
        %v521 = vunpack.c.l.b16 %v377
        %v522 = vunpack.c.l.b16 %v378
        %v523 = vunpack.c.l.b16 %v379
        %v524 = vunpack.c.l.b16 %v380
        %v525 = vunpack.c.l.b16 %v381
        %v526 = vunpack.c.l.b16 %v382
        %v527 = vunpack.c.l.b16 %v383
        %v528 = vunpack.c.l.b16 %v384
        %v529 = vunpack.c.l.b16 %v385
        %v530 = vunpack.c.l.b16 %v386
        %v531 = vunpack.c.l.b16 %v387
        %v532 = vunpack.c.l.b16 %v388
        %v533 = vunpack.c.l.b16 %v389
        %v534 = vunpack.c.l.b16 %v390
        %v535 = vunpack.c.l.b16 %v391
        %v536 = vunpack.c.l.b16 %v392
        %v537 = vunpack.c.l.b16 %v393
        %v538 = vunpack.c.l.b16 %v394
        %v539 = vunpack.c.l.b16 %v395
        %v540 = vunpack.c.l.b16 %v396
        %v541 = vunpack.c.l.b16 %v397
        %v542 = vunpack.c.l.b16 %v398
        %v543 = vunpack.c.l.b16 %v399
        %v544 = vunpack.c.l.b16 %v400
        %v545 = vunpack.c.l.b16 %v401
        %v546 = vunpack.c.l.b16 %v402
        %v547 = vunpack.c.l.b16 %v403
        %v548 = vunpack.c.l.b16 %v404
        %v549 = vunpack.c.l.b16 %v405
        %v550 = vunpack.c.l.b16 %v406
        %v551 = vunpack.c.l.b16 %v407
        %v552 = vunpack.c.l.b16 %v408
        %v553 = vunpack.c.l.b16 %v409
        %v554 = vunpack.c.l.b16 %v410
        %v555 = vunpack.c.l.b16 %v411
        %v556 = vpack.c.b16 %v485, %v484
        %v557 = vpack.c.b16 %v487, %v486
        %v558 = vpack.c.b16 %v489, %v488
        %v559 = vpack.c.b16 %v491, %v490
        %v560 = vpack.c.b16 %v493, %v492
        %v561 = vpack.c.b16 %v495, %v494
        %v562 = vpack.c.b16 %v497, %v496
        %v563 = vpack.c.b16 %v499, %v498
        %v564 = vpack.c.b16 %v501, %v500
        %v565 = vpack.c.b16 %v503, %v502
        %v566 = vpack.c.b16 %v505, %v504
        %v567 = vpack.c.b16 %v507, %v506
        %v568 = vpack.c.b16 %v509, %v508
        %v569 = vpack.c.b16 %v511, %v510
        %v570 = vpack.c.b16 %v513, %v512
        %v571 = vpack.c.b16 %v515, %v514
        %v572 = vpack.c.b16 %v517, %v516
        %v573 = vpack.c.b16 %v519, %v518
        %v574 = vpack.c.b16 %v521, %v520
        %v575 = vpack.c.b16 %v523, %v522
        %v576 = vpack.c.b16 %v525, %v524
        %v577 = vpack.c.b16 %v527, %v526
        %v578 = vpack.c.b16 %v529, %v528
        %v579 = vpack.c.b16 %v531, %v530
        %v580 = vpack.c.b16 %v533, %v532
        %v581 = vpack.c.b16 %v535, %v534
        %v582 = vpack.c.b16 %v537, %v536
        %v583 = vpack.c.b16 %v539, %v538
        %v584 = vpack.c.b16 %v541, %v540
        %v585 = vpack.c.b16 %v543, %v542
        %v586 = vpack.c.b16 %v545, %v544
        %v587 = vpack.c.b16 %v547, %v546
        %v588 = vpack.c.b16 %v549, %v548
        %v589 = vpack.c.b16 %v551, %v550
        %v590 = vpack.c.b16 %v553, %v552
        %v591 = vpack.c.b16 %v555, %v554
        %v629 = vsel %vm311, %v308, 0
        %v632 = vsel %vm311, %v310, 0
        %634 = vmatpush.bf16.msra.mxu0 %v563
        %635 = vmatpush.bf16.msra.mxu0 %v562
        %636 = vmatpush.bf16.msra.mxu0 %v561
        %637 = vmatpush.bf16.msra.mxu0 %v560
        %638 = vmatpush.bf16.msra.mxu0 %v559
        %639 = vmatpush.bf16.msra.mxu0 %v558
        %640 = vmatpush.bf16.msra.mxu0 %v557
        %641 = vmatpush.bf16.msra.mxu0 %v556
        %642 = vmatmul.bf16.gmra.mxu0 %v313
        %v643 = vpop.f32.mrf.mxu0
        %v644 = vadd.f32 0.0, %v643
        %v645 = vpop.f32.mrf.mxu0
        %v646 = vadd.f32 0.0, %v645
        %647 = vmatmul.bf16.gmra.mxu0 %v316
        %v648 = vpop.f32.mrf.mxu0
        %v649 = vadd.f32 0.0, %v648
        %v650 = vpop.f32.mrf.mxu0
        %v651 = vadd.f32 0.0, %v650
        %652 = vdwg.mxu0
        %653 = vmatpush.bf16.msra.mxu0 %v571
        %654 = vmatpush.bf16.msra.mxu0 %v570
        %655 = vmatpush.bf16.msra.mxu0 %v569
        %656 = vmatpush.bf16.msra.mxu0 %v568
        %657 = vmatpush.bf16.msra.mxu0 %v567
        %658 = vmatpush.bf16.msra.mxu0 %v566
        %659 = vmatpush.bf16.msra.mxu0 %v565
        %660 = vmatpush.bf16.msra.mxu0 %v564
        %661 = vmatmul.bf16.gmra.mxu0 %v320
        %v662 = vpop.f32.mrf.mxu0
        %v663 = vadd.f32 %v644, %v662
        %v664 = vpop.f32.mrf.mxu0
        %v665 = vadd.f32 %v646, %v664
        %666 = vmatmul.bf16.gmra.mxu0 %v324
        %v667 = vpop.f32.mrf.mxu0
        %v668 = vadd.f32 %v649, %v667
        %v669 = vpop.f32.mrf.mxu0
        %v670 = vadd.f32 %v651, %v669
        %671 = vdwg.mxu0
        %672 = vmatpush.bf16.msra.mxu0 %v579
        %673 = vmatpush.bf16.msra.mxu0 %v578
        %674 = vmatpush.bf16.msra.mxu0 %v577
        %675 = vmatpush.bf16.msra.mxu0 %v576
        %676 = vmatpush.bf16.msra.mxu0 %v575
        %677 = vmatpush.bf16.msra.mxu0 %v574
        %678 = vmatpush.bf16.msra.mxu0 %v573
        %679 = vmatpush.bf16.msra.mxu0 %v572
        %680 = vmatmul.bf16.gmra.mxu0 %v328
        %v681 = vpop.f32.mrf.mxu0
        %v682 = vadd.f32 %v663, %v681
        %v683 = vpop.f32.mrf.mxu0
        %v684 = vadd.f32 %v665, %v683
        %685 = vmatmul.bf16.gmra.mxu0 %v332
        %v686 = vpop.f32.mrf.mxu0
        %v687 = vadd.f32 %v668, %v686
        %v688 = vpop.f32.mrf.mxu0
        %v689 = vadd.f32 %v670, %v688
        %690 = vdwg.mxu0
        %691 = vmatpush.bf16.msra.mxu0 %v587
        %692 = vmatpush.bf16.msra.mxu0 %v586
        %693 = vmatpush.bf16.msra.mxu0 %v585
        %694 = vmatpush.bf16.msra.mxu0 %v584
        %695 = vmatpush.bf16.msra.mxu0 %v583
        %696 = vmatpush.bf16.msra.mxu0 %v582
        %697 = vmatpush.bf16.msra.mxu0 %v581
        %698 = vmatpush.bf16.msra.mxu0 %v580
        %699 = vmatmul.bf16.gmra.mxu0 %v335
        %v700 = vpop.f32.mrf.mxu0
        %v701 = vadd.f32 %v682, %v700
        %v702 = vpop.f32.mrf.mxu0
        %v703 = vadd.f32 %v684, %v702
        %704 = vmatmul.bf16.gmra.mxu0 %v338
        %v705 = vpop.f32.mrf.mxu0
        %v706 = vadd.f32 %v687, %v705
        %v707 = vpop.f32.mrf.mxu0
        %v708 = vadd.f32 %v689, %v707
        %709 = vdwg.mxu0
        %710 = vmatpush.bf16.msra.mxu0 0
        %711 = vmatpush.bf16.msra.mxu0 0
        %712 = vmatpush.bf16.msra.mxu0 0
        %713 = vmatpush.bf16.msra.mxu0 0
        %714 = vmatpush.bf16.msra.mxu0 %v591
        %715 = vmatpush.bf16.msra.mxu0 %v590
        %716 = vmatpush.bf16.msra.mxu0 %v589
        %717 = vmatpush.bf16.msra.mxu0 %v588
        %718 = vmatmul.bf16.gmra.mxu0 %v629
        %v719 = vpop.f32.mrf.mxu0
        %v720 = vadd.f32 %v701, %v719
        %v721 = vpop.f32.mrf.mxu0
        %v722 = vadd.f32 %v703, %v721
        %723 = vmatmul.bf16.gmra.mxu0 %v632
        %v724 = vpop.f32.mrf.mxu0
        %v725 = vadd.f32 %v706, %v724
        %v726 = vpop.f32.mrf.mxu0
        %v727 = vadd.f32 %v708, %v726
        %728 = vdwg.mxu0
        %v729 = vld [vmem:[%s2] sm:$0x1]
        %v731 = vperm.slane %v729, 0
        %v733 = vmul.f32 %v720, %v731
        %v734 = vmul.f32 %v722, %v731
        %v735 = vmul.f32 %v725, %v731
        %v736 = vmul.f32 %v727, %v731
        %v737 = vld [vmem:[%s3] sm:$0x1]
        %v739 = vperm.slane %v737, 0
        %v741 = vadd.f32 %v733, %v739
        %v742 = vadd.f32 %v734, %v739
        %v743 = vadd.f32 %v735, %v739
        %v744 = vadd.f32 %v736, %v739
        %v745 = vmax.f32 %v741, 0.0
        %v746 = vmax.f32 %v742, 0.0
        %v747 = vmax.f32 %v743, 0.0
        %v748 = vmax.f32 %v744, 0.0
        %v749 = vpack.c.bf16 %v745, %v745
        %v750 = vpack.c.bf16 %v746, %v746
        %v751 = vpack.c.bf16 %v747, %v747
        %v752 = vpack.c.bf16 %v748, %v748
        %vm753 = vcmask 257024
        %754 = vst.msk [vmem:[%s190] sm:$0xf] %vm753, %v749
        %755 = vst.msk [vmem:[%s190 + $0x4] sm:$0xf] %vm753, %v750
        %756 = vst.msk [vmem:[%s190 + $0x8] sm:$0xf] %vm753, %v751
        %757 = vst.msk [vmem:[%s190 + $0xc] sm:$0xf] %vm753, %v752
        %s758 = sand.u32 %s115, 1
        %s759 = scalar_lea.sflag [#allocation3], %s758
        %s760 = sand.u32 %s115, 1
        %s761 = smul.addr %s760, 16
        %s762 = scalar_lea.vmem [#allocation2], %s761
        // Predicated region
        $region37: #{tpu_custom_call.1} parent=35 // pred_check
          %p763 = pneg %p125
        $region38: #{tpu_custom_call.1} parent=35 // pred_check_branch
          %765 = sbr.rel (%p763) target = $region40
        $region39: #{tpu_custom_call.1} parent=35 // pred_region
          %767 = vsyncadd %s759, 0
          %s768 = smul.addr %s18, 4
          %s769 = smul.addr %s768, 4
          %s770 = scalar_lea.hbm %s4, %s769
          %s771 = sshll.u32 %s762, 4
          %s772 = int_to_ptr.vmem [resolvable:$true] %s771
          %s773 = sshll.u32 %s770, 4
          %s774 = int_to_ptr.hbm [resolvable:$true] %s773
          %779 = dma.vmem_to_hbm [thread:$0]  %s772, 256, %s774, %s759, 64, 64, 4
        $region40: #{tpu_custom_call.1} parent=35 // pred_fallthru
          _
      $region36: #{tpu_custom_call.1} parent=5 // pred_fallthru
        _
      %p780 = scmp.le.s32.totalorder 2, %s13
      // Predicated region
      $region41: #{tpu_custom_call.1} parent=5 // pred_check
        %p781 = pneg %p780
      $region42: #{tpu_custom_call.1} parent=5 // pred_check_branch
        %783 = sbr.rel (%p781) target = $region44
      $region43: #{tpu_custom_call.1} parent=5 // pred_region
        %s784 = ssub.s32 %s13, 2
        // Predicated region
        $region45: #{tpu_custom_call.1} parent=43 // pred_check
          %p785 = pneg %p131
        $region46: #{tpu_custom_call.1} parent=43 // pred_check_branch
          %787 = sbr.rel (%p785) target = $region48
        $region47: #{tpu_custom_call.1} parent=43 // pred_region
          %s788 = sand.u32 %s116, 1
          %s789 = scalar_lea.sflag [#allocation3], %s788
          %s790 = sand.u32 %s116, 1
          %s791 = smul.addr %s790, 16
          %s792 = scalar_lea.vmem [#allocation2], %s791
          %794 = dma.done %s789, 256
        $region48: #{tpu_custom_call.1} parent=43 // pred_fallthru
          _
      $region44: #{tpu_custom_call.1} parent=5 // pred_fallthru
        _
    $region6: #{tpu_custom_call.1} parent=1 // loop_footer
      %s17 = sadd.s32 1, %s13
    $region7: #{tpu_custom_call.1} parent=1 // loop_footer_branch
      %12 = sbr.rel target = $region3
    $region8: #{tpu_custom_call.1} parent=1 // loop_exit
      _
    %795 = vsyncpa [#allocation3], 1
    %s796 = scalar_lea.sflag [#allocation3], 1
    %797 = vsyncpa %s796, 1

</llo_original>
